<compile_context>
chip_gen: v7x
topology: tpu7x:2x2x1
jax: 0.10.0
libtpu: 0.0.40
codegen_flags: <defaults>
</compile_context>

<pallas_src>
import jax
import jax.numpy as jnp
from jax import lax
from jax.experimental import pallas as pl
from jax.experimental.pallas import tpu as pltpu


def basic_block_kernel(x_ref, w1_ref, s1_ref, b1_ref, a_ref,
                       w2_ref, s2_ref, b2_ref, out_ref, pad_ref):
    # x_ref:   (1, H, W*C)     bf16 lane-dense input block
    # w*_ref:  (3, W*C, W*C)   bf16 banded conv weights (kh-major; kw+Cin in K)
    # s*/b*:   (1, W*C)        f32 folded BN scale / shift, tiled over W
    # a_ref:   (1, W*C)        f32 PReLU slope, tiled (scalar nn.PReLU())
    # out_ref: (1, H, W*C)     bf16 output block
    # pad_ref: VMEM (H+2, W*C) bf16 H-padded activation buffer
    H = out_ref.shape[1]
    WC = out_ref.shape[2]

    # Zero only the two halo rows; the interior is fully overwritten below.
    # Re-done every grid step so it stays correct when the "parallel" batch
    # axis is split across TensorCores (each core has its own scratch).
    zero_row = jnp.zeros((1, WC), jnp.bfloat16)
    pad_ref[0:1, :] = zero_row
    pad_ref[H + 1:H + 2, :] = zero_row

    def conv3x3(w_ref):
        # 3 MXU matmuls (one per kh); kw and Cin are folded into K=W*C via
        # the banded weight matrices.  SSA accumulation keeps the partial
        # sums on the MXU result path (no VMEM accumulator round trips).
        acc = jnp.dot(pad_ref[0:H, :], w_ref[0],
                      preferred_element_type=jnp.float32)
        acc += jnp.dot(pad_ref[1:H + 1, :], w_ref[1],
                       preferred_element_type=jnp.float32)
        acc += jnp.dot(pad_ref[2:H + 2, :], w_ref[2],
                       preferred_element_type=jnp.float32)
        return acc

    x = x_ref[0]                                   # bf16 (H, W*C)

    # ---- conv1 -> bn1 (folded) -> PReLU ----
    pad_ref[1:H + 1, :] = x                        # no cast: pad buf is bf16
    y1 = conv3x3(w1_ref) * s1_ref[...] + b1_ref[...]
    y1 = jnp.where(y1 > 0, y1, a_ref[...] * y1)

    # ---- conv2 -> bn2 (folded) -> +residual -> PReLU ----
    pad_ref[1:H + 1, :] = y1.astype(jnp.bfloat16)  # single cast on the path
    y2 = conv3x3(w2_ref) * s2_ref[...] + b2_ref[...]
    y2 = y2 + x.astype(jnp.float32)                # residual: one cast, reused x
    y2 = jnp.where(y2 > 0, y2, a_ref[...] * y2)

    out_ref[0] = y2.astype(out_ref.dtype)          # full-lane bf16 store


def _fold_bn(gamma, beta, mean, var, eps):
    inv = gamma / jnp.sqrt(var + eps)
    return inv, beta - mean * inv


def _band_weights(w_hwio, w_dim, c):
    """(3, 3, C, C) HWIO -> (3, W*C, W*C) block-banded matrices.

    B_kh[(w+kw-1)*C + ci, w*C + co] = w[kh, kw, ci, co]; out-of-range kw taps
    are simply omitted, which implements the width zero-padding.
    """
    mats = []
    for kh in range(3):
        b = jnp.zeros((w_dim * c, w_dim * c), jnp.float32)
        for kw in range(3):
            shift = jnp.eye(w_dim, k=1 - kw, dtype=jnp.float32)
            b = b + jnp.kron(shift, w_hwio[kh, kw].astype(jnp.float32))
        mats.append(b)
    return jnp.stack(mats, axis=0)


def basic_block_pallas(x_nchw, w1_hwio, gamma1, beta1, prelu_a,
                       w2_hwio, gamma2, beta2,
                       running_mean1, running_var1,
                       running_mean2, running_var2, eps=1e-5):
    B, C, H, W = x_nchw.shape
    WC = W * C

    # Fold BN (inference form) into per-channel scale/shift, then tile across
    # W so the (1, W*C) lane-dense broadcast is free inside the kernel.
    s1, b1 = _fold_bn(gamma1, beta1, running_mean1, running_var1, eps)
    s2, b2 = _fold_bn(gamma2, beta2, running_mean2, running_var2, eps)
    s1t = jnp.tile(s1.astype(jnp.float32), W).reshape(1, WC)
    b1t = jnp.tile(b1.astype(jnp.float32), W).reshape(1, WC)
    s2t = jnp.tile(s2.astype(jnp.float32), W).reshape(1, WC)
    b2t = jnp.tile(b2.astype(jnp.float32), W).reshape(1, WC)
    a_t = jnp.full((1, WC), jnp.asarray(prelu_a, jnp.float32))

    # NCHW -> lane-dense (B, H, W*C) bf16; banded bf16 conv weights.
    x_ld = jnp.transpose(x_nchw, (0, 2, 3, 1)).reshape(B, H, WC)
    x_ld = x_ld.astype(jnp.bfloat16)
    w1b = _band_weights(w1_hwio, W, C).astype(jnp.bfloat16)
    w2b = _band_weights(w2_hwio, W, C).astype(jnp.bfloat16)

    out_ld = pl.pallas_call(
        basic_block_kernel,
        out_shape=jax.ShapeDtypeStruct((B, H, WC), jnp.bfloat16),
        grid_spec=pltpu.PrefetchScalarGridSpec(
            num_scalar_prefetch=0,
            grid=(B,),
            in_specs=[
                pl.BlockSpec((1, H, WC), lambda b: (b, 0, 0)),
                pl.BlockSpec((3, WC, WC), lambda b: (0, 0, 0)),
                pl.BlockSpec((1, WC), lambda b: (0, 0)),
                pl.BlockSpec((1, WC), lambda b: (0, 0)),
                pl.BlockSpec((1, WC), lambda b: (0, 0)),
                pl.BlockSpec((3, WC, WC), lambda b: (0, 0, 0)),
                pl.BlockSpec((1, WC), lambda b: (0, 0)),
                pl.BlockSpec((1, WC), lambda b: (0, 0)),
            ],
            out_specs=pl.BlockSpec((1, H, WC), lambda b: (b, 0, 0)),
            scratch_shapes=[
                pltpu.VMEM((H + 2, WC), jnp.bfloat16),  # H-padded activation
            ],
        ),
        compiler_params=pltpu.CompilerParams(
            dimension_semantics=("parallel",),
            vmem_limit_bytes=32 * 1024 * 1024,
        ),
    )(x_ld, w1b, s1t, b1t, a_t, w2b, s2t, b2t)

    # lane-dense bf16 -> NCHW f32 (PyTorch output convention).
    out_nhwc = out_ld.astype(jnp.float32).reshape(B, H, W, C)
    return jnp.transpose(out_nhwc, (0, 3, 1, 2))


def basic_block_ref(x_nchw, w1_hwio, gamma1, beta1, prelu_a, w2_hwio,
                    gamma2, beta2, rm1, rv1, rm2, rv2, eps=1e-5):
    """Pure-JAX f32 reference (inference-mode BN with real running stats)."""
    x = jnp.transpose(x_nchw, (0, 2, 3, 1)).astype(jnp.float32)
    dn = ("NHWC", "HWIO", "NHWC")
    s1, b1 = _fold_bn(gamma1, beta1, rm1, rv1, eps)
    s2, b2 = _fold_bn(gamma2, beta2, rm2, rv2, eps)
    o = lax.conv_general_dilated(x, w1_hwio, (1, 1), "SAME", dimension_numbers=dn)
    o = o * s1 + b1
    o = jnp.where(o > 0, o, prelu_a * o)
    o = lax.conv_general_dilated(o, w2_hwio, (1, 1), "SAME", dimension_numbers=dn)
    o = o * s2 + b2
    o = o + x
    o = jnp.where(o > 0, o, prelu_a * o)
    return jnp.transpose(o, (0, 3, 1, 2))


if __name__ == "__main__":
    B, C, H, W = 2, 8, 16, 16  # inplanes == planes == 8, stride=1, no downsample
    key = jax.random.PRNGKey(0)
    ks = jax.random.split(key, 11)

    x = jax.random.normal(ks[0], (B, C, H, W), jnp.float32)

    # conv weights in HWIO layout (3, 3, Cin, Cout)
    w1 = jax.random.normal(ks[1], (3, 3, C, C), jnp.float32) * 0.1
    w2 = jax.random.normal(ks[2], (3, 3, C, C), jnp.float32) * 0.1

    gamma1 = 1.0 + 0.1 * jax.random.normal(ks[3], (C,), jnp.float32)
    beta1 = 0.1 * jax.random.normal(ks[4], (C,), jnp.float32)
    gamma2 = 1.0 + 0.1 * jax.random.normal(ks[5], (C,), jnp.float32)
    beta2 = 0.1 * jax.random.normal(ks[6], (C,), jnp.float32)
    # Non-trivial running stats so BN folding is actually exercised.
    rm1 = 0.1 * jax.random.normal(ks[7], (C,), jnp.float32)
    rv1 = 1.0 + 0.2 * jax.random.uniform(ks[8], (C,), jnp.float32)
    rm2 = 0.05 * jax.random.normal(ks[9], (C,), jnp.float32)
    rv2 = 0.8 + 0.3 * jax.random.uniform(ks[10], (C,), jnp.float32)
    prelu_a = jnp.float32(0.25)  # nn.PReLU() default init (single shared slope)

    out = basic_block_pallas(x, w1, gamma1, beta1, prelu_a, w2, gamma2, beta2,
                             rm1, rv1, rm2, rv2)
    out = jax.block_until_ready(out)

    ref = basic_block_ref(x, w1, gamma1, beta1, prelu_a, w2, gamma2, beta2,
                          rm1, rv1, rm2, rv2)
    assert out.shape == (B, C, H, W)
    # bf16 MXU inputs, bf16 residual and bf16 output -> looser tolerance.
    assert jnp.allclose(out, ref, rtol=5e-2, atol=5e-2), float(
        jnp.max(jnp.abs(out - ref)))

    print("KERNEL_OK")
</pallas_src>

<mosaic_0001>
module attributes {stable_mosaic.version = 11 : i64} {
  func.func @basic_block_kernel(%arg0: i32, %arg1: memref<1x16x128xbf16, #tpu.memory_space<vmem>>, %arg2: memref<3x128x128xbf16, #tpu.memory_space<vmem>>, %arg3: memref<1x128xf32, #tpu.memory_space<vmem>>, %arg4: memref<1x128xf32, #tpu.memory_space<vmem>>, %arg5: memref<1x128xf32, #tpu.memory_space<vmem>>, %arg6: memref<3x128x128xbf16, #tpu.memory_space<vmem>>, %arg7: memref<1x128xf32, #tpu.memory_space<vmem>>, %arg8: memref<1x128xf32, #tpu.memory_space<vmem>>, %arg9: memref<1x16x128xbf16, #tpu.memory_space<vmem>>, %arg10: memref<18x128xbf16, #tpu.memory_space<vmem>>) attributes {dimension_semantics = [#tpu.dimension_semantics<parallel>], iteration_bounds = array<i64: 2>, scalar_prefetch = 0 : i64, scratch_operands = 1 : i64, tpu.core_type = #tpu.core_type<tc>, window_params = [{transform_indices = @transform_0, window_bounds = array<i64: 1, 16, 128>}, {pipeline_mode = #tpu.pipeline_mode<synchronous>, transform_indices = @transform_1, window_bounds = array<i64: 3, 128, 128>}, {pipeline_mode = #tpu.pipeline_mode<synchronous>, transform_indices = @transform_2, window_bounds = array<i64: 1, 128>}, {pipeline_mode = #tpu.pipeline_mode<synchronous>, transform_indices = @transform_3, window_bounds = array<i64: 1, 128>}, {pipeline_mode = #tpu.pipeline_mode<synchronous>, transform_indices = @transform_4, window_bounds = array<i64: 1, 128>}, {pipeline_mode = #tpu.pipeline_mode<synchronous>, transform_indices = @transform_5, window_bounds = array<i64: 3, 128, 128>}, {pipeline_mode = #tpu.pipeline_mode<synchronous>, transform_indices = @transform_6, window_bounds = array<i64: 1, 128>}, {pipeline_mode = #tpu.pipeline_mode<synchronous>, transform_indices = @transform_7, window_bounds = array<i64: 1, 128>}, {transform_indices = @transform_8, window_bounds = array<i64: 1, 16, 128>}]} {
    %cst = arith.constant 0.000000e+00 : bf16
    %0 = vector.broadcast %cst : bf16 to vector<1x128xbf16>
    %c0 = arith.constant 0 : index
    %c0_0 = arith.constant 0 : index
    %1 = vector.load %arg10[%c0, %c0_0] : memref<18x128xbf16, #tpu.memory_space<vmem>>, vector<1x128xbf16>
    tpu.vector_store %arg10[%c0, %c0_0], %0 {strides = array<i32>} : memref<18x128xbf16, #tpu.memory_space<vmem>>, vector<1x128xbf16>,
    %c17 = arith.constant 17 : index
    %c0_1 = arith.constant 0 : index
    %2 = vector.load %arg10[%c17, %c0_1] : memref<18x128xbf16, #tpu.memory_space<vmem>>, vector<1x128xbf16>
    tpu.vector_store %arg10[%c17, %c0_1], %0 {strides = array<i32>} : memref<18x128xbf16, #tpu.memory_space<vmem>>, vector<1x128xbf16>,
    %c0_2 = arith.constant 0 : index
    %c0_3 = arith.constant 0 : index
    %c0_4 = arith.constant 0 : index
    %3 = vector.load %arg1[%c0_2, %c0_3, %c0_4] : memref<1x16x128xbf16, #tpu.memory_space<vmem>>, vector<1x16x128xbf16>
    %4 = vector.shape_cast %3 : vector<1x16x128xbf16> to vector<16x128xbf16>
    %c1 = arith.constant 1 : index
    %c0_5 = arith.constant 0 : index
    %5 = vector.load %arg10[%c1, %c0_5] : memref<18x128xbf16, #tpu.memory_space<vmem>>, vector<16x128xbf16>
    tpu.vector_store %arg10[%c1, %c0_5], %4 {strides = array<i32>} : memref<18x128xbf16, #tpu.memory_space<vmem>>, vector<16x128xbf16>,
    %c0_6 = arith.constant 0 : index
    %c0_7 = arith.constant 0 : index
    %6 = vector.load %arg10[%c0_6, %c0_7] : memref<18x128xbf16, #tpu.memory_space<vmem>>, vector<16x128xbf16>
    %c0_8 = arith.constant 0 : index
    %c0_9 = arith.constant 0 : index
    %c0_10 = arith.constant 0 : index
    %7 = vector.load %arg2[%c0_8, %c0_9, %c0_10] : memref<3x128x128xbf16, #tpu.memory_space<vmem>>, vector<1x128x128xbf16>
    %8 = vector.shape_cast %7 : vector<1x128x128xbf16> to vector<128x128xbf16>
    %cst_11 = arith.constant dense<0.000000e+00> : vector<16x128xf32>
    %9 = tpu.matmul %6, %8, %cst_11 {dimension_numbers = #tpu.dot_dimension_numbers<[1], [0], [0], [1], [0, 0, 1, 1], [], []>} : vector<16x128xbf16>, vector<128x128xbf16>, vector<16x128xf32> -> vector<16x128xf32>
    %c1_12 = arith.constant 1 : index
    %c0_13 = arith.constant 0 : index
    %10 = vector.load %arg10[%c1_12, %c0_13] : memref<18x128xbf16, #tpu.memory_space<vmem>>, vector<16x128xbf16>
    %c1_14 = arith.constant 1 : index
    %c0_15 = arith.constant 0 : index
    %c0_16 = arith.constant 0 : index
    %11 = vector.load %arg2[%c1_14, %c0_15, %c0_16] : memref<3x128x128xbf16, #tpu.memory_space<vmem>>, vector<1x128x128xbf16>
    %12 = vector.shape_cast %11 : vector<1x128x128xbf16> to vector<128x128xbf16>
    %cst_17 = arith.constant dense<0.000000e+00> : vector<16x128xf32>
    %13 = tpu.matmul %10, %12, %cst_17 {dimension_numbers = #tpu.dot_dimension_numbers<[1], [0], [0], [1], [0, 0, 1, 1], [], []>} : vector<16x128xbf16>, vector<128x128xbf16>, vector<16x128xf32> -> vector<16x128xf32>
    %14 = arith.addf %9, %13 : vector<16x128xf32>
    %c2 = arith.constant 2 : index
    %c0_18 = arith.constant 0 : index
    %15 = vector.load %arg10[%c2, %c0_18] : memref<18x128xbf16, #tpu.memory_space<vmem>>, vector<16x128xbf16>
    %c2_19 = arith.constant 2 : index
    %c0_20 = arith.constant 0 : index
    %c0_21 = arith.constant 0 : index
    %16 = vector.load %arg2[%c2_19, %c0_20, %c0_21] : memref<3x128x128xbf16, #tpu.memory_space<vmem>>, vector<1x128x128xbf16>
    %17 = vector.shape_cast %16 : vector<1x128x128xbf16> to vector<128x128xbf16>
    %cst_22 = arith.constant dense<0.000000e+00> : vector<16x128xf32>
    %18 = tpu.matmul %15, %17, %cst_22 {dimension_numbers = #tpu.dot_dimension_numbers<[1], [0], [0], [1], [0, 0, 1, 1], [], []>} : vector<16x128xbf16>, vector<128x128xbf16>, vector<16x128xf32> -> vector<16x128xf32>
    %19 = arith.addf %14, %18 : vector<16x128xf32>
    %c0_23 = arith.constant 0 : index
    %c0_24 = arith.constant 0 : index
    %20 = vector.load %arg3[%c0_23, %c0_24] : memref<1x128xf32, #tpu.memory_space<vmem>>, vector<1x128xf32>
    %21 = vector.broadcast %20 : vector<1x128xf32> to vector<16x128xf32>
    %22 = arith.mulf %19, %21 : vector<16x128xf32>
    %c0_25 = arith.constant 0 : index
    %c0_26 = arith.constant 0 : index
    %23 = vector.load %arg4[%c0_25, %c0_26] : memref<1x128xf32, #tpu.memory_space<vmem>>, vector<1x128xf32>
    %24 = vector.broadcast %23 : vector<1x128xf32> to vector<16x128xf32>
    %25 = arith.addf %22, %24 : vector<16x128xf32>
    %cst_27 = arith.constant 0.000000e+00 : f32
    %26 = vector.broadcast %cst_27 : f32 to vector<16x128xf32>
    %27 = arith.cmpf ogt, %25, %26 : vector<16x128xf32>
    %c0_28 = arith.constant 0 : index
    %c0_29 = arith.constant 0 : index
    %28 = vector.load %arg5[%c0_28, %c0_29] : memref<1x128xf32, #tpu.memory_space<vmem>>, vector<1x128xf32>
    %29 = vector.broadcast %28 : vector<1x128xf32> to vector<16x128xf32>
    %30 = arith.mulf %29, %25 : vector<16x128xf32>
    %31 = arith.select %27, %25, %30 : vector<16x128xi1>, vector<16x128xf32>
    %32 = arith.truncf %31 : vector<16x128xf32> to vector<16x128xbf16>
    %c1_30 = arith.constant 1 : index
    %c0_31 = arith.constant 0 : index
    %33 = vector.load %arg10[%c1_30, %c0_31] : memref<18x128xbf16, #tpu.memory_space<vmem>>, vector<16x128xbf16>
    tpu.vector_store %arg10[%c1_30, %c0_31], %32 {strides = array<i32>} : memref<18x128xbf16, #tpu.memory_space<vmem>>, vector<16x128xbf16>,
    %c0_32 = arith.constant 0 : index
    %c0_33 = arith.constant 0 : index
    %34 = vector.load %arg10[%c0_32, %c0_33] : memref<18x128xbf16, #tpu.memory_space<vmem>>, vector<16x128xbf16>
    %c0_34 = arith.constant 0 : index
    %c0_35 = arith.constant 0 : index
    %c0_36 = arith.constant 0 : index
    %35 = vector.load %arg6[%c0_34, %c0_35, %c0_36] : memref<3x128x128xbf16, #tpu.memory_space<vmem>>, vector<1x128x128xbf16>
    %36 = vector.shape_cast %35 : vector<1x128x128xbf16> to vector<128x128xbf16>
    %cst_37 = arith.constant dense<0.000000e+00> : vector<16x128xf32>
    %37 = tpu.matmul %34, %36, %cst_37 {dimension_numbers = #tpu.dot_dimension_numbers<[1], [0], [0], [1], [0, 0, 1, 1], [], []>} : vector<16x128xbf16>, vector<128x128xbf16>, vector<16x128xf32> -> vector<16x128xf32>
    %c1_38 = arith.constant 1 : index
    %c0_39 = arith.constant 0 : index
    %38 = vector.load %arg10[%c1_38, %c0_39] : memref<18x128xbf16, #tpu.memory_space<vmem>>, vector<16x128xbf16>
    %c1_40 = arith.constant 1 : index
    %c0_41 = arith.constant 0 : index
    %c0_42 = arith.constant 0 : index
    %39 = vector.load %arg6[%c1_40, %c0_41, %c0_42] : memref<3x128x128xbf16, #tpu.memory_space<vmem>>, vector<1x128x128xbf16>
    %40 = vector.shape_cast %39 : vector<1x128x128xbf16> to vector<128x128xbf16>
    %cst_43 = arith.constant dense<0.000000e+00> : vector<16x128xf32>
    %41 = tpu.matmul %38, %40, %cst_43 {dimension_numbers = #tpu.dot_dimension_numbers<[1], [0], [0], [1], [0, 0, 1, 1], [], []>} : vector<16x128xbf16>, vector<128x128xbf16>, vector<16x128xf32> -> vector<16x128xf32>
    %42 = arith.addf %37, %41 : vector<16x128xf32>
    %c2_44 = arith.constant 2 : index
    %c0_45 = arith.constant 0 : index
    %43 = vector.load %arg10[%c2_44, %c0_45] : memref<18x128xbf16, #tpu.memory_space<vmem>>, vector<16x128xbf16>
    %c2_46 = arith.constant 2 : index
    %c0_47 = arith.constant 0 : index
    %c0_48 = arith.constant 0 : index
    %44 = vector.load %arg6[%c2_46, %c0_47, %c0_48] : memref<3x128x128xbf16, #tpu.memory_space<vmem>>, vector<1x128x128xbf16>
    %45 = vector.shape_cast %44 : vector<1x128x128xbf16> to vector<128x128xbf16>
    %cst_49 = arith.constant dense<0.000000e+00> : vector<16x128xf32>
    %46 = tpu.matmul %43, %45, %cst_49 {dimension_numbers = #tpu.dot_dimension_numbers<[1], [0], [0], [1], [0, 0, 1, 1], [], []>} : vector<16x128xbf16>, vector<128x128xbf16>, vector<16x128xf32> -> vector<16x128xf32>
    %47 = arith.addf %42, %46 : vector<16x128xf32>
    %c0_50 = arith.constant 0 : index
    %c0_51 = arith.constant 0 : index
    %48 = vector.load %arg7[%c0_50, %c0_51] : memref<1x128xf32, #tpu.memory_space<vmem>>, vector<1x128xf32>
    %49 = vector.broadcast %48 : vector<1x128xf32> to vector<16x128xf32>
    %50 = arith.mulf %47, %49 : vector<16x128xf32>
    %c0_52 = arith.constant 0 : index
    %c0_53 = arith.constant 0 : index
    %51 = vector.load %arg8[%c0_52, %c0_53] : memref<1x128xf32, #tpu.memory_space<vmem>>, vector<1x128xf32>
    %52 = vector.broadcast %51 : vector<1x128xf32> to vector<16x128xf32>
    %53 = arith.addf %50, %52 : vector<16x128xf32>
    %54 = arith.extf %4 : vector<16x128xbf16> to vector<16x128xf32>
    %55 = arith.addf %53, %54 : vector<16x128xf32>
    %cst_54 = arith.constant 0.000000e+00 : f32
    %56 = vector.broadcast %cst_54 : f32 to vector<16x128xf32>
    %57 = arith.cmpf ogt, %55, %56 : vector<16x128xf32>
    %c0_55 = arith.constant 0 : index
    %c0_56 = arith.constant 0 : index
    %58 = vector.load %arg5[%c0_55, %c0_56] : memref<1x128xf32, #tpu.memory_space<vmem>>, vector<1x128xf32>
    %59 = vector.broadcast %58 : vector<1x128xf32> to vector<16x128xf32>
    %60 = arith.mulf %59, %55 : vector<16x128xf32>
    %61 = arith.select %57, %55, %60 : vector<16x128xi1>, vector<16x128xf32>
    %62 = arith.truncf %61 : vector<16x128xf32> to vector<16x128xbf16>
    %c0_57 = arith.constant 0 : index
    %c0_58 = arith.constant 0 : index
    %c0_59 = arith.constant 0 : index
    %63 = vector.load %arg9[%c0_57, %c0_58, %c0_59] : memref<1x16x128xbf16, #tpu.memory_space<vmem>>, vector<1x16x128xbf16>
    %64 = vector.shape_cast %63 : vector<1x16x128xbf16> to vector<16x128xbf16>
    %65 = vector.shape_cast %62 : vector<16x128xbf16> to vector<1x16x128xbf16>
    tpu.vector_store %arg9[%c0_57, %c0_58, %c0_59], %65 {strides = array<i32>} : memref<1x16x128xbf16, #tpu.memory_space<vmem>>, vector<1x16x128xbf16>,
    return
  }
  func.func @transform_0(%arg0: i32) -> (i32, i32, i32) {
    %c0_i32 = arith.constant 0 : i32
    %c0_i32_0 = arith.constant 0 : i32
    %c0_i32_1 = arith.constant 0 : i32
    return %arg0, %c0_i32, %c0_i32_0 : i32, i32, i32
  }
  func.func @transform_1(%arg0: i32) -> (i32, i32, i32) {
    %c0_i32 = arith.constant 0 : i32
    %c0_i32_0 = arith.constant 0 : i32
    %c0_i32_1 = arith.constant 0 : i32
    %c0_i32_2 = arith.constant 0 : i32
    return %c0_i32, %c0_i32_0, %c0_i32_1 : i32, i32, i32
  }
  func.func @transform_2(%arg0: i32) -> (i32, i32) {
    %c0_i32 = arith.constant 0 : i32
    %c0_i32_0 = arith.constant 0 : i32
    %c0_i32_1 = arith.constant 0 : i32
    return %c0_i32, %c0_i32_0 : i32, i32
  }
  func.func @transform_3(%arg0: i32) -> (i32, i32) {
    %c0_i32 = arith.constant 0 : i32
    %c0_i32_0 = arith.constant 0 : i32
    %c0_i32_1 = arith.constant 0 : i32
    return %c0_i32, %c0_i32_0 : i32, i32
  }
  func.func @transform_4(%arg0: i32) -> (i32, i32) {
    %c0_i32 = arith.constant 0 : i32
    %c0_i32_0 = arith.constant 0 : i32
    %c0_i32_1 = arith.constant 0 : i32
    return %c0_i32, %c0_i32_0 : i32, i32
  }
  func.func @transform_5(%arg0: i32) -> (i32, i32, i32) {
    %c0_i32 = arith.constant 0 : i32
    %c0_i32_0 = arith.constant 0 : i32
    %c0_i32_1 = arith.constant 0 : i32
    %c0_i32_2 = arith.constant 0 : i32
    return %c0_i32, %c0_i32_0, %c0_i32_1 : i32, i32, i32
  }
  func.func @transform_6(%arg0: i32) -> (i32, i32) {
    %c0_i32 = arith.constant 0 : i32
    %c0_i32_0 = arith.constant 0 : i32
    %c0_i32_1 = arith.constant 0 : i32
    return %c0_i32, %c0_i32_0 : i32, i32
  }
  func.func @transform_7(%arg0: i32) -> (i32, i32) {
    %c0_i32 = arith.constant 0 : i32
    %c0_i32_0 = arith.constant 0 : i32
    %c0_i32_1 = arith.constant 0 : i32
    return %c0_i32, %c0_i32_0 : i32, i32
  }
  func.func @transform_8(%arg0: i32) -> (i32, i32, i32) {
    %c0_i32 = arith.constant 0 : i32
    %c0_i32_0 = arith.constant 0 : i32
    %c0_i32_1 = arith.constant 0 : i32
    return %arg0, %c0_i32, %c0_i32_0 : i32, i32, i32
  }
}

</mosaic_0001>

<llo_original>
// kernel: tpu_custom_call.1
$region0: #{tpu_custom_call.1}
  #allocation0 [shape = 'u32[]', space=smem, size = 0x4, offset = 0x4, fixed_abs, tag = 'smem constant byte address 0x4 - core index']
  #allocation1 [shape = 'u32[144,128]{1,0:T(1,128)}', space=vmem, size = 0x12000, scoped, tag = 'internal scratch']
  #allocation2 [shape = 'bf16[18,128]{1,0:T(8,128)(2,1)}', space=vmem, size = 0x1800, scoped, tag = 'scratch operand']
  %s0 = inlined_call_operand.hbm [shape: bf16[2,16,128], index: 0, kind: input, shape index: {}]
  %s1 = inlined_call_operand.hbm [shape: bf16[3,128,128], index: 1, kind: input, shape index: {}]
  %s2 = inlined_call_operand.vmem [shape: f32[1,128], index: 2, kind: input, shape index: {}]
  %s3 = inlined_call_operand.vmem [shape: f32[1,128], index: 3, kind: input, shape index: {}]
  %s4 = inlined_call_operand.vmem [shape: f32[1,128], index: 4, kind: input, shape index: {}]
  %s5 = inlined_call_operand.hbm [shape: bf16[3,128,128], index: 5, kind: input, shape index: {}]
  %s6 = inlined_call_operand.vmem [shape: f32[1,128], index: 6, kind: input, shape index: {}]
  %s7 = inlined_call_operand.vmem [shape: f32[1,128], index: 7, kind: input, shape index: {}]
  %s8 = inlined_call_operand.hbm [shape: bf16[2,16,128], index: 8, kind: output, shape index: {}]
  %s9 = sld [smem:[#allocation0]]
  $region77: #{tpu_custom_call.1} parent=0
    _
  %s11 = ssub.s32 1, %s9
  %s12 = scalar_select 0, %s11, %s9
  $region1: #{tpu_custom_call.1} parent=0
    #allocation3 [shape = 'u8[8192]{0}', space=vmem, size = 0x2000, scoped, tag = 'input window, operand 0']
    #allocation4 [shape = 's32[2]{0}', space=sflag, size = 0x8, scoped, tag = 'scoped memory for tpu_custom_call.1']
    #allocation5 [shape = 's32[2]{0}', space=sflag, size = 0x8, scoped, tag = 'scoped memory for tpu_custom_call.1']
    #allocation6 [shape = 'u8[98304]{0}', space=vmem, size = 0x18000, scoped, tag = 'input window, operand 1, single buffered']
    #allocation7 [shape = 's32[1]{0}', space=sflag, size = 0x4, scoped, tag = 'scoped memory for tpu_custom_call.1']
    #allocation8 [shape = 'u8[98304]{0}', space=vmem, size = 0x18000, scoped, tag = 'input window, operand 5, single buffered']
    #allocation9 [shape = 'u8[8192]{0}', space=vmem, size = 0x2000, scoped, tag = 'output window, operand 0']
    %13 = vsyncpa [#allocation4], 0
    %s14 = scalar_lea.sflag [#allocation4], 1
    %15 = vsyncpa %s14, 0
    %16 = vsyncpa [#allocation7], 0
    %17 = vsyncpa [#allocation5], 0
    %s18 = scalar_lea.sflag [#allocation5], 1
    %19 = vsyncpa %s18, 0
    loop: start=0, step=1, limit=4
    $region2: #{tpu_custom_call.1} parent=1 // loop_pre_header
      _
    $region3: #{tpu_custom_call.1} parent=1 // loop_header
      %s21 = sphi 0, %s25
      %p22 = scmp.ge.s32.totalorder %s21, 4
      %s31 = sphi 0, %s33
      %s34 = sphi 0, %s31
      %s35 = sphi 0, %s34
      %s51 = sphi 0, %s35
      %s55 = sphi 0, %s55
      %s57 = sphi 0, %s55
      %s58 = sphi 0, %s57
      %s72 = sphi 0, %s58
      %s76 = sphi 0, %s76
      %s78 = sphi 0, %s76
      %s79 = sphi 0, %s78
      %s93 = sphi 0, %s79
      %s97 = sphi 0, %s97
      %s99 = sphi 0, %s97
      %s100 = sphi 0, %s99
      %s114 = sphi 0, %s100
      %s118 = sphi 0, %s118
      %s120 = sphi 0, %s118
      %s121 = sphi 0, %s120
      %s135 = sphi 0, %s121
      %s139 = sphi 0, %s139
      %s141 = sphi 0, %s139
      %s142 = sphi 0, %s141
      %s156 = sphi 0, %s142
      %s160 = sphi 0, %s160
      %s162 = sphi 0, %s160
      %s163 = sphi 0, %s162
      %s177 = sphi 0, %s163
      %s181 = sphi 0, %s181
      %s183 = sphi 0, %s181
      %s184 = sphi 0, %s183
      %s198 = sphi 0, %s184
      %s204 = sphi 0, %s206
      %s207 = sphi 0, %s204
      %s208 = sphi 0, %s207
      %s224 = sphi 0, %s208
    $region4: #{tpu_custom_call.1} parent=1 // loop_header_branch
      %24 = sbr.rel (%p22) target = $region8
    $region5: #{tpu_custom_call.1} parent=1 // loop_body
      %s26 = ssub.s32 %s21, 1
      %s27 = ssub.s32 %s21, 2
      %s28 = sadd.s32 %s21, 1
      %s29 = ssub.s32 %s21, %s28
      %p30 = scmp.eq.s32.totalorder %s29, 0
      %s32 = sadd.s32 %s31, 1
      %s33 = scalar_select %p30, %s31, %s32
      %p36 = pneg %p30
      %p37 = scmp.eq.s32.totalorder %s21, 1
      %p38 = por %p36, %p37
      %p39 = scmp.ne.s32.totalorder %s31, %s34
      %p40 = scmp.eq.s32.totalorder %s21, 0
      %p41 = por %p39, %p40
      %p42 = scmp.ne.s32.totalorder %s31, %s34
      %p43 = scmp.eq.s32.totalorder %s26, 1
      %p44 = por %p42, %p43
      %p45 = scmp.ne.s32.totalorder %s34, %s35
      %p46 = scmp.eq.s32.totalorder %s26, 0
      %p47 = por %p45, %p46
      %p48 = scmp.ne.s32.totalorder %s34, %s35
      %p49 = scmp.eq.s32.totalorder %s27, 1
      %p50 = por %p48, %p49
      %p52 = scmp.ne.s32.totalorder %s35, %s51
      %p53 = scmp.eq.s32.totalorder %s27, 0
      %p54 = por %p52, %p53
      %s56 = sadd.s32 %s55, 1
      %p59 = scmp.eq.s32.totalorder %s21, 1
      %p60 = scmp.ne.s32.totalorder %s55, %s57
      %p61 = scmp.eq.s32.totalorder %s21, 0
      %p62 = por %p60, %p61
      %p63 = scmp.ne.s32.totalorder %s55, %s57
      %p64 = scmp.eq.s32.totalorder %s26, 1
      %p65 = por %p63, %p64
      %p66 = scmp.ne.s32.totalorder %s57, %s58
      %p67 = scmp.eq.s32.totalorder %s26, 0
      %p68 = por %p66, %p67
      %p69 = scmp.ne.s32.totalorder %s57, %s58
      %p70 = scmp.eq.s32.totalorder %s27, 1
      %p71 = por %p69, %p70
      %p73 = scmp.ne.s32.totalorder %s58, %s72
      %p74 = scmp.eq.s32.totalorder %s27, 0
      %p75 = por %p73, %p74
      %s77 = sadd.s32 %s76, 1
      %p80 = scmp.eq.s32.totalorder %s21, 1
      %p81 = scmp.ne.s32.totalorder %s76, %s78
      %p82 = scmp.eq.s32.totalorder %s21, 0
      %p83 = por %p81, %p82
      %p84 = scmp.ne.s32.totalorder %s76, %s78
      %p85 = scmp.eq.s32.totalorder %s26, 1
      %p86 = por %p84, %p85
      %p87 = scmp.ne.s32.totalorder %s78, %s79
      %p88 = scmp.eq.s32.totalorder %s26, 0
      %p89 = por %p87, %p88
      %p90 = scmp.ne.s32.totalorder %s78, %s79
      %p91 = scmp.eq.s32.totalorder %s27, 1
      %p92 = por %p90, %p91
      %p94 = scmp.ne.s32.totalorder %s79, %s93
      %p95 = scmp.eq.s32.totalorder %s27, 0
      %p96 = por %p94, %p95
      %s98 = sadd.s32 %s97, 1
      %p101 = scmp.eq.s32.totalorder %s21, 1
      %p102 = scmp.ne.s32.totalorder %s97, %s99
      %p103 = scmp.eq.s32.totalorder %s21, 0
      %p104 = por %p102, %p103
      %p105 = scmp.ne.s32.totalorder %s97, %s99
      %p106 = scmp.eq.s32.totalorder %s26, 1
      %p107 = por %p105, %p106
      %p108 = scmp.ne.s32.totalorder %s99, %s100
      %p109 = scmp.eq.s32.totalorder %s26, 0
      %p110 = por %p108, %p109
      %p111 = scmp.ne.s32.totalorder %s99, %s100
      %p112 = scmp.eq.s32.totalorder %s27, 1
      %p113 = por %p111, %p112
      %p115 = scmp.ne.s32.totalorder %s100, %s114
      %p116 = scmp.eq.s32.totalorder %s27, 0
      %p117 = por %p115, %p116
      %s119 = sadd.s32 %s118, 1
      %p122 = scmp.eq.s32.totalorder %s21, 1
      %p123 = scmp.ne.s32.totalorder %s118, %s120
      %p124 = scmp.eq.s32.totalorder %s21, 0
      %p125 = por %p123, %p124
      %p126 = scmp.ne.s32.totalorder %s118, %s120
      %p127 = scmp.eq.s32.totalorder %s26, 1
      %p128 = por %p126, %p127
      %p129 = scmp.ne.s32.totalorder %s120, %s121
      %p130 = scmp.eq.s32.totalorder %s26, 0
      %p131 = por %p129, %p130
      %p132 = scmp.ne.s32.totalorder %s120, %s121
      %p133 = scmp.eq.s32.totalorder %s27, 1
      %p134 = por %p132, %p133
      %p136 = scmp.ne.s32.totalorder %s121, %s135
      %p137 = scmp.eq.s32.totalorder %s27, 0
      %p138 = por %p136, %p137
      %s140 = sadd.s32 %s139, 1
      %p143 = scmp.eq.s32.totalorder %s21, 1
      %p144 = scmp.ne.s32.totalorder %s139, %s141
      %p145 = scmp.eq.s32.totalorder %s21, 0
      %p146 = por %p144, %p145
      %p147 = scmp.ne.s32.totalorder %s139, %s141
      %p148 = scmp.eq.s32.totalorder %s26, 1
      %p149 = por %p147, %p148
      %p150 = scmp.ne.s32.totalorder %s141, %s142
      %p151 = scmp.eq.s32.totalorder %s26, 0
      %p152 = por %p150, %p151
      %p153 = scmp.ne.s32.totalorder %s141, %s142
      %p154 = scmp.eq.s32.totalorder %s27, 1
      %p155 = por %p153, %p154
      %p157 = scmp.ne.s32.totalorder %s142, %s156
      %p158 = scmp.eq.s32.totalorder %s27, 0
      %p159 = por %p157, %p158
      %s161 = sadd.s32 %s160, 1
      %p164 = scmp.eq.s32.totalorder %s21, 1
      %p165 = scmp.ne.s32.totalorder %s160, %s162
      %p166 = scmp.eq.s32.totalorder %s21, 0
      %p167 = por %p165, %p166
      %p168 = scmp.ne.s32.totalorder %s160, %s162
      %p169 = scmp.eq.s32.totalorder %s26, 1
      %p170 = por %p168, %p169
      %p171 = scmp.ne.s32.totalorder %s162, %s163
      %p172 = scmp.eq.s32.totalorder %s26, 0
      %p173 = por %p171, %p172
      %p174 = scmp.ne.s32.totalorder %s162, %s163
      %p175 = scmp.eq.s32.totalorder %s27, 1
      %p176 = por %p174, %p175
      %p178 = scmp.ne.s32.totalorder %s163, %s177
      %p179 = scmp.eq.s32.totalorder %s27, 0
      %p180 = por %p178, %p179
      %s182 = sadd.s32 %s181, 1
      %p185 = scmp.eq.s32.totalorder %s21, 1
      %p186 = scmp.ne.s32.totalorder %s181, %s183
      %p187 = scmp.eq.s32.totalorder %s21, 0
      %p188 = por %p186, %p187
      %p189 = scmp.ne.s32.totalorder %s181, %s183
      %p190 = scmp.eq.s32.totalorder %s26, 1
      %p191 = por %p189, %p190
      %p192 = scmp.ne.s32.totalorder %s183, %s184
      %p193 = scmp.eq.s32.totalorder %s26, 0
      %p194 = por %p192, %p193
      %p195 = scmp.ne.s32.totalorder %s183, %s184
      %p196 = scmp.eq.s32.totalorder %s27, 1
      %p197 = por %p195, %p196
      %p199 = scmp.ne.s32.totalorder %s184, %s198
      %p200 = scmp.eq.s32.totalorder %s27, 0
      %p201 = por %p199, %p200
      %s202 = ssub.s32 %s21, %s28
      %p203 = scmp.eq.s32.totalorder %s202, 0
      %s205 = sadd.s32 %s204, 1
      %s206 = scalar_select %p203, %s204, %s205
      %p209 = pneg %p203
      %p210 = scmp.eq.s32.totalorder %s21, 1
      %p211 = por %p209, %p210
      %p212 = scmp.ne.s32.totalorder %s204, %s207
      %p213 = scmp.eq.s32.totalorder %s21, 0
      %p214 = por %p212, %p213
      %p215 = scmp.ne.s32.totalorder %s204, %s207
      %p216 = scmp.eq.s32.totalorder %s26, 1
      %p217 = por %p215, %p216
      %p218 = scmp.ne.s32.totalorder %s207, %s208
      %p219 = scmp.eq.s32.totalorder %s26, 0
      %p220 = por %p218, %p219
      %p221 = scmp.ne.s32.totalorder %s207, %s208
      %p222 = scmp.eq.s32.totalorder %s27, 1
      %p223 = por %p221, %p222
      %p225 = scmp.ne.s32.totalorder %s208, %s224
      %p226 = scmp.eq.s32.totalorder %s27, 0
      %p227 = por %p225, %p226
      %p228 = scmp.le.s32.totalorder 1, %s21
      %p229 = scmp.lt.s32.totalorder %s21, 3
      %p230 = pnand %p228, %p229
      %p231 = pneg %p230
      // Predicated region
      $region9: #{tpu_custom_call.1} parent=5 // pred_check
        _
      $region10: #{tpu_custom_call.1} parent=5 // pred_check_branch
        %233 = sbr.rel (%p230) target = $region12
      $region11: #{tpu_custom_call.1} parent=5 // pred_region
        %s234 = ssub.s32 %s21, 1
        // Predicated region
        $region13: #{tpu_custom_call.1} parent=11 // pred_check
          %p235 = pneg %p68
        $region14: #{tpu_custom_call.1} parent=11 // pred_check_branch
          %237 = sbr.rel (%p235) target = $region16
        $region15: #{tpu_custom_call.1} parent=11 // pred_region
          %s239 = ssub.s32 3072, 3072
          %240 = vsyncadd [#allocation7], %s239
          %s241 = sshll.u32 [#allocation6], 4
          %s242 = int_to_ptr.vmem [resolvable:$true] %s241
          %247 = dma.hbm_to_vmem [thread:$0]  %s1, 3072, %s242, [#allocation7], 64, 64, 4
        $region16: #{tpu_custom_call.1} parent=11 // pred_fallthru
          _
        // Predicated region
        $region17: #{tpu_custom_call.1} parent=11 // pred_check
          %p248 = pneg %p89
        $region18: #{tpu_custom_call.1} parent=11 // pred_check_branch
          %250 = sbr.rel (%p248) target = $region20
        $region19: #{tpu_custom_call.1} parent=11 // pred_region
          _
        $region20: #{tpu_custom_call.1} parent=11 // pred_fallthru
          _
        // Predicated region
        $region21: #{tpu_custom_call.1} parent=11 // pred_check
          %p251 = pneg %p110
        $region22: #{tpu_custom_call.1} parent=11 // pred_check_branch
          %253 = sbr.rel (%p251) target = $region24
        $region23: #{tpu_custom_call.1} parent=11 // pred_region
          _
        $region24: #{tpu_custom_call.1} parent=11 // pred_fallthru
          _
        // Predicated region
        $region25: #{tpu_custom_call.1} parent=11 // pred_check
          %p254 = pneg %p131
        $region26: #{tpu_custom_call.1} parent=11 // pred_check_branch
          %256 = sbr.rel (%p254) target = $region28
        $region27: #{tpu_custom_call.1} parent=11 // pred_region
          _
        $region28: #{tpu_custom_call.1} parent=11 // pred_fallthru
          _
        // Predicated region
        $region29: #{tpu_custom_call.1} parent=11 // pred_check
          %p257 = pneg %p152
        $region30: #{tpu_custom_call.1} parent=11 // pred_check_branch
          %259 = sbr.rel (%p257) target = $region32
        $region31: #{tpu_custom_call.1} parent=11 // pred_region
          %s261 = ssub.s32 3072, 3072
          %262 = vsyncadd [#allocation7], %s261
          %s263 = sshll.u32 [#allocation8], 4
          %s264 = int_to_ptr.vmem [resolvable:$true] %s263
          %269 = dma.hbm_to_vmem [thread:$0]  %s5, 3072, %s264, [#allocation7], 64, 64, 4
        $region32: #{tpu_custom_call.1} parent=11 // pred_fallthru
          _
        // Predicated region
        $region33: #{tpu_custom_call.1} parent=11 // pred_check
          %p270 = pneg %p173
        $region34: #{tpu_custom_call.1} parent=11 // pred_check_branch
          %272 = sbr.rel (%p270) target = $region36
        $region35: #{tpu_custom_call.1} parent=11 // pred_region
          _
        $region36: #{tpu_custom_call.1} parent=11 // pred_fallthru
          _
        // Predicated region
        $region37: #{tpu_custom_call.1} parent=11 // pred_check
          %p273 = pneg %p194
        $region38: #{tpu_custom_call.1} parent=11 // pred_check_branch
          %275 = sbr.rel (%p273) target = $region40
        $region39: #{tpu_custom_call.1} parent=11 // pred_region
          _
        $region40: #{tpu_custom_call.1} parent=11 // pred_fallthru
          _
      $region12: #{tpu_custom_call.1} parent=5 // pred_fallthru
        _
      %p276 = scmp.lt.s32.totalorder %s21, 2
      // Predicated region
      $region41: #{tpu_custom_call.1} parent=5 // pred_check
        %p277 = pneg %p276
      $region42: #{tpu_custom_call.1} parent=5 // pred_check_branch
        %279 = sbr.rel (%p277) target = $region44
      $region43: #{tpu_custom_call.1} parent=5 // pred_region
        // Predicated region
        $region45: #{tpu_custom_call.1} parent=43 // pred_check
          %p280 = pneg %p41
        $region46: #{tpu_custom_call.1} parent=43 // pred_check_branch
          %282 = sbr.rel (%p280) target = $region48
        $region47: #{tpu_custom_call.1} parent=43 // pred_region
          %s283 = sand.u32 %s31, 1
          %s284 = scalar_lea.sflag [#allocation4], %s283
          %s285 = sand.u32 %s31, 1
          %s286 = smul.addr %s285, 8
          %s287 = scalar_lea.vmem [#allocation3], %s286
          %s289 = ssub.s32 128, 128
          %290 = vsyncadd %s284, %s289
          %s291 = smul.addr %s21, 2
          %s292 = smul.addr %s291, 64
          %s293 = scalar_lea.hbm %s0, %s292
          %s294 = sshll.u32 %s287, 4
          %s295 = int_to_ptr.vmem [resolvable:$true] %s294
          %300 = dma.hbm_to_vmem [thread:$0]  %s293, 128, %s295, %s284, 64, 64, 4
        $region48: #{tpu_custom_call.1} parent=43 // pred_fallthru
          _
      $region44: #{tpu_custom_call.1} parent=5 // pred_fallthru
        _
      %p301 = scmp.le.s32.totalorder 1, %s21
      %p302 = scmp.lt.s32.totalorder %s21, 3
      %p303 = pnand %p301, %p302
      %p304 = pneg %p303
      // Predicated region
      $region49: #{tpu_custom_call.1} parent=5 // pred_check
        _
      $region50: #{tpu_custom_call.1} parent=5 // pred_check_branch
        %306 = sbr.rel (%p303) target = $region52
      $region51: #{tpu_custom_call.1} parent=5 // pred_region
        %s307 = ssub.s32 %s21, 1
        %s308 = sand.u32 %s34, 1
        %s309 = scalar_lea.sflag [#allocation4], %s308
        %s310 = sand.u32 %s34, 1
        %s311 = smul.addr %s310, 8
        %s312 = scalar_lea.vmem [#allocation3], %s311
        // Predicated region
        $region53: #{tpu_custom_call.1} parent=51 // pred_check
          %p313 = pneg %p47
        $region54: #{tpu_custom_call.1} parent=51 // pred_check_branch
          %315 = sbr.rel (%p313) target = $region56
        $region55: #{tpu_custom_call.1} parent=51 // pred_region
          %316 = dma.done %s309, 128
        $region56: #{tpu_custom_call.1} parent=51 // pred_fallthru
          _
        // Predicated region
        $region57: #{tpu_custom_call.1} parent=51 // pred_check
          %p317 = pneg %p68
        $region58: #{tpu_custom_call.1} parent=51 // pred_check_branch
          %319 = sbr.rel (%p317) target = $region60
        $region59: #{tpu_custom_call.1} parent=51 // pred_region
          %320 = dma.done [#allocation7], 3072
        $region60: #{tpu_custom_call.1} parent=51 // pred_fallthru
          _
        // Predicated region
        $region61: #{tpu_custom_call.1} parent=51 // pred_check
          %p321 = pneg %p152
        $region62: #{tpu_custom_call.1} parent=51 // pred_check_branch
          %323 = sbr.rel (%p321) target = $region64
        $region63: #{tpu_custom_call.1} parent=51 // pred_region
          %324 = dma.done [#allocation7], 3072
        $region64: #{tpu_custom_call.1} parent=51 // pred_fallthru
          _
        %s325 = sand.u32 %s34, 1
        %s326 = scalar_lea.sflag [#allocation4], %s325
        %s327 = sand.u32 %s34, 1
        %s328 = smul.addr %s327, 8
        %s329 = scalar_lea.vmem [#allocation3], %s328
        %p330 = pneg %p47
        %p331 = pneg %p44
        %p332 = pneg %p68
        %p333 = pneg %p65
        %p334 = pneg %p89
        %p335 = pneg %p86
        %p336 = pneg %p110
        %p337 = pneg %p107
        %p338 = pneg %p131
        %p339 = pneg %p128
        %p340 = pneg %p152
        %p341 = pneg %p149
        %p342 = pneg %p173
        %p343 = pneg %p170
        %p344 = pneg %p194
        %p345 = pneg %p191
        %p346 = pneg %p220
        %p347 = pneg %p217
        %s348 = sand.u32 %s207, 1
        %s349 = scalar_lea.sflag [#allocation5], %s348
        %s350 = sand.u32 %s207, 1
        %s351 = smul.addr %s350, 8
        %s352 = scalar_lea.vmem [#allocation9], %s351
        %vm354 = vcmask 1040384
        %vm355 = vsmask.f32 256
        %vm356 = vmand %vm354, %vm355
        %v357 = vld [vmem:[#allocation2] sm:$0x1]
        %v358 = vsel %vm356, 0, %v357
        %359 = vst [vmem:[#allocation2] sm:$0x1] %v358
        %vm360 = vsmask.f32 7938
        %vm361 = vmand %vm354, %vm360
        %v362 = vld [vmem:[#allocation2 + $0x8] sm:$0x1]
        %v363 = vsel %vm361, 0, %v362
        %364 = vst [vmem:[#allocation2 + $0x8] sm:$0x1] %v363
        %v365 = vld [vmem:[%s312] sm:$0xf]
        %v366 = vld [vmem:[%s312 + $0x4] sm:$0xf]
        %vm367 = vsmask.f32 4368
        %vm368 = vmor %vm355, %vm367
        %v370 = vshrl.u32 %v365, 16
        %v372 = vrot.slane %v370, 7
        %v373 = vshll.u32 %v365, 16
        %v375 = vor.u32 %v372, %v373
        %v376 = vrot.slane %v372, 4
        %v378 = vshrl.u32 %v366, 16
        %v380 = vrot.slane %v378, 7
        %v381 = vshll.u32 %v366, 16
        %v383 = vor.u32 %v380, %v381
        %v384 = vsel %vm368, %v376, %v383
        %v385 = vrot.slane %v380, 4
        %vm389 = vcmask 1043456
        %vm390 = vmand %vm389, %vm360
        %v391 = vld [vmem:[#allocation2] sm:$0xf]
        %v392 = vsel %vm390, %v375, %v391
        %393 = vst [vmem:[#allocation2] sm:$0xf] %v392
        %394 = vst [vmem:[#allocation2 + $0x4] sm:$0xf] %v384
        %v395 = vld [vmem:[#allocation2 + $0x8] sm:$0x1]
        %v396 = vsel %vm356, %v385, %v395
        %397 = vst [vmem:[#allocation2 + $0x8] sm:$0x1] %v396
        %v398 = vld [vmem:[#allocation2] sm:$0xf]
        %v399 = vld [vmem:[#allocation2 + $0x4] sm:$0xf]
        %v400 = vld [vmem:[#allocation6] sm:$0xf]
        %v401 = vld [vmem:[#allocation6 + $0x4] sm:$0xf]
        %v402 = vld [vmem:[#allocation6 + $0x8] sm:$0xf]
        %v403 = vld [vmem:[#allocation6 + $0xc] sm:$0xf]
        %v404 = vld [vmem:[#allocation6 + $0x10] sm:$0xf]
        %v405 = vld [vmem:[#allocation6 + $0x14] sm:$0xf]
        %v406 = vld [vmem:[#allocation6 + $0x18] sm:$0xf]
        %v407 = vld [vmem:[#allocation6 + $0x1c] sm:$0xf]
        %v408 = vld [vmem:[#allocation6 + $0x20] sm:$0xf]
        %v409 = vld [vmem:[#allocation6 + $0x24] sm:$0xf]
        %v410 = vld [vmem:[#allocation6 + $0x28] sm:$0xf]
        %v411 = vld [vmem:[#allocation6 + $0x2c] sm:$0xf]
        %v412 = vld [vmem:[#allocation6 + $0x30] sm:$0xf]
        %v413 = vld [vmem:[#allocation6 + $0x34] sm:$0xf]
        %v414 = vld [vmem:[#allocation6 + $0x38] sm:$0xf]
        %v415 = vld [vmem:[#allocation6 + $0x3c] sm:$0xf]
        %v416 = vld [vmem:[#allocation2 + $0x8] sm:$0x1]
        %s417 = scalar_lea.vmem [#allocation6], 64
        %v418 = vld [vmem:[%s417] sm:$0xf]
        %v419 = vld [vmem:[%s417 + $0x4] sm:$0xf]
        %v420 = vld [vmem:[%s417 + $0x8] sm:$0xf]
        %v421 = vld [vmem:[%s417 + $0xc] sm:$0xf]
        %v422 = vld [vmem:[%s417 + $0x10] sm:$0xf]
        %v423 = vld [vmem:[%s417 + $0x14] sm:$0xf]
        %v424 = vld [vmem:[%s417 + $0x18] sm:$0xf]
        %v425 = vld [vmem:[%s417 + $0x1c] sm:$0xf]
        %v426 = vld [vmem:[%s417 + $0x20] sm:$0xf]
        %v427 = vld [vmem:[%s417 + $0x24] sm:$0xf]
        %v428 = vld [vmem:[%s417 + $0x28] sm:$0xf]
        %v429 = vld [vmem:[%s417 + $0x2c] sm:$0xf]
        %v430 = vld [vmem:[%s417 + $0x30] sm:$0xf]
        %v431 = vld [vmem:[%s417 + $0x34] sm:$0xf]
        %v432 = vld [vmem:[%s417 + $0x38] sm:$0xf]
        %v433 = vld [vmem:[%s417 + $0x3c] sm:$0xf]
        %v437 = vunpack.c.l.b16 %v398
        %v438 = vunpack.c.l.b16 %v399
        %v439 = vunpack.c.l.b16 %v416
        %v440 = vpack.c.b16 %v438, %v437
        %v441 = vpack.c.b16 %v439, %v439
        %vm442 = vsmask.f32 7424
        %v444 = vshrl.u32 %v440, 16
        %v446 = vshll.u32 %v440, 16
        %v448 = vrot.slane %v446, 1
        %v449 = vor.u32 %v444, %v448
        %v451 = vshll.u32 %v441, 16
        %v453 = vrot.slane %v451, 1
        %v454 = vsel %vm442, %v449, %v453
        %v472 = vunpack.c.l.b16 %v418
        %v473 = vunpack.c.l.b16 %v419
        %v474 = vunpack.c.l.b16 %v420
        %v475 = vunpack.c.l.b16 %v421
        %v476 = vunpack.c.l.b16 %v422
        %v477 = vunpack.c.l.b16 %v423
        %v478 = vunpack.c.l.b16 %v424
        %v479 = vunpack.c.l.b16 %v425
        %v480 = vunpack.c.l.b16 %v426
        %v481 = vunpack.c.l.b16 %v427
        %v482 = vunpack.c.l.b16 %v428
        %v483 = vunpack.c.l.b16 %v429
        %v484 = vunpack.c.l.b16 %v430
        %v485 = vunpack.c.l.b16 %v431
        %v486 = vunpack.c.l.b16 %v432
        %v487 = vunpack.c.l.b16 %v433
        %v488 = vpack.c.b16 %v473, %v472
        %v489 = vpack.c.b16 %v475, %v474
        %v490 = vpack.c.b16 %v477, %v476
        %v491 = vpack.c.b16 %v479, %v478
        %v492 = vpack.c.b16 %v481, %v480
        %v493 = vpack.c.b16 %v483, %v482
        %v494 = vpack.c.b16 %v485, %v484
        %v495 = vpack.c.b16 %v487, %v486
        %504 = vmatprep.subr.bf16.mxu0 0
        %505 = vmatpush1.bf16.msra.mxu0 %v488
        %506 = vmatprep.subr.bf16.mxu0 0
        %507 = vmatpush1.bf16.msra.mxu0 %v489
        %508 = vmatprep.subr.bf16.mxu0 0
        %509 = vmatpush1.bf16.msra.mxu0 %v490
        %510 = vmatprep.subr.bf16.mxu0 0
        %511 = vmatpush1.bf16.msra.mxu0 %v491
        %512 = vmatprep.subr.bf16.mxu0 0
        %513 = vmatpush1.bf16.msra.mxu0 %v492
        %514 = vmatprep.subr.bf16.mxu0 0
        %515 = vmatpush1.bf16.msra.mxu0 %v493
        %516 = vmatprep.subr.bf16.mxu0 0
        %517 = vmatpush1.bf16.msra.mxu0 %v494
        %518 = vmatprep.subr.bf16.mxu0 0
        %519 = vmatpush1.bf16.msra.mxu0 %v495
        %520 = vmatprep.subr.bf16.mxu0 0
        %521 = vmatpush1.bf16.msra.mxu0 0
        %522 = vmatprep.subr.bf16.mxu0 0
        %523 = vmatpush1.bf16.msra.mxu0 0
        %524 = vmatprep.subr.bf16.mxu0 0
        %525 = vmatpush1.bf16.msra.mxu0 0
        %526 = vmatprep.subr.bf16.mxu0 0
        %527 = vmatpush1.bf16.msra.mxu0 0
        %528 = vmatprep.subr.bf16.mxu0 0
        %529 = vmatpush1.bf16.msra.mxu0 0
        %530 = vmatprep.subr.bf16.mxu0 0
        %531 = vmatpush1.bf16.msra.mxu0 0
        %532 = vmatprep.subr.bf16.mxu0 0
        %533 = vmatpush1.bf16.msra.mxu0 0
        %534 = vmatprep.subr.bf16.mxu0 0
        %535 = vmatpush1.bf16.msra.mxu0 0
        %536 = vmatprep.mubr.bf16.mxu0 0
        %537 = vmatmul.mubr.bf16.gmra.mrb[0].mxu0 %v454
        %v538 = vpop.f32.mrb[0].mxu0
        %v539 = vadd.f32 0.0, %v538
        %v540 = vpop.f32.mrb[0].mxu0
        %v541 = vpop.f32.mrb[0].mxu0
        %v542 = vadd.f32 0.0, %v541
        %v543 = vpop.f32.mrb[0].mxu0
        %544 = vdwg.mxu0
        %v562 = vunpack.c.l.b16 %v400
        %v563 = vunpack.c.l.b16 %v401
        %v564 = vunpack.c.l.b16 %v402
        %v565 = vunpack.c.l.b16 %v403
        %v566 = vunpack.c.l.b16 %v404
        %v567 = vunpack.c.l.b16 %v405
        %v568 = vunpack.c.l.b16 %v406
        %v569 = vunpack.c.l.b16 %v407
        %v570 = vunpack.c.l.b16 %v408
        %v571 = vunpack.c.l.b16 %v409
        %v572 = vunpack.c.l.b16 %v410
        %v573 = vunpack.c.l.b16 %v411
        %v574 = vunpack.c.l.b16 %v412
        %v575 = vunpack.c.l.b16 %v413
        %v576 = vunpack.c.l.b16 %v414
        %v577 = vunpack.c.l.b16 %v415
        %v578 = vpack.c.b16 %v563, %v562
        %v579 = vpack.c.b16 %v565, %v564
        %v580 = vpack.c.b16 %v567, %v566
        %v581 = vpack.c.b16 %v569, %v568
        %v582 = vpack.c.b16 %v571, %v570
        %v583 = vpack.c.b16 %v573, %v572
        %v584 = vpack.c.b16 %v575, %v574
        %v585 = vpack.c.b16 %v577, %v576
        %594 = vmatprep.subr.bf16.mxu0 0
        %595 = vmatpush1.bf16.msra.mxu0 %v578
        %596 = vmatprep.subr.bf16.mxu0 0
        %597 = vmatpush1.bf16.msra.mxu0 %v579
        %598 = vmatprep.subr.bf16.mxu0 0
        %599 = vmatpush1.bf16.msra.mxu0 %v580
        %600 = vmatprep.subr.bf16.mxu0 0
        %601 = vmatpush1.bf16.msra.mxu0 %v581
        %602 = vmatprep.subr.bf16.mxu0 0
        %603 = vmatpush1.bf16.msra.mxu0 %v582
        %604 = vmatprep.subr.bf16.mxu0 0
        %605 = vmatpush1.bf16.msra.mxu0 %v583
        %606 = vmatprep.subr.bf16.mxu0 0
        %607 = vmatpush1.bf16.msra.mxu0 %v584
        %608 = vmatprep.subr.bf16.mxu0 0
        %609 = vmatpush1.bf16.msra.mxu0 %v585
        %610 = vmatprep.subr.bf16.mxu0 0
        %611 = vmatpush1.bf16.msra.mxu0 0
        %612 = vmatprep.subr.bf16.mxu0 0
        %613 = vmatpush1.bf16.msra.mxu0 0
        %614 = vmatprep.subr.bf16.mxu0 0
        %615 = vmatpush1.bf16.msra.mxu0 0
        %616 = vmatprep.subr.bf16.mxu0 0
        %617 = vmatpush1.bf16.msra.mxu0 0
        %618 = vmatprep.subr.bf16.mxu0 0
        %619 = vmatpush1.bf16.msra.mxu0 0
        %620 = vmatprep.subr.bf16.mxu0 0
        %621 = vmatpush1.bf16.msra.mxu0 0
        %622 = vmatprep.subr.bf16.mxu0 0
        %623 = vmatpush1.bf16.msra.mxu0 0
        %624 = vmatprep.subr.bf16.mxu0 0
        %625 = vmatpush1.bf16.msra.mxu0 0
        %626 = vmatprep.mubr.bf16.mxu0 0
        %627 = vmatmul.mubr.bf16.gmra.mrb[0].mxu0 %v440
        %v628 = vpop.f32.mrb[0].mxu0
        %v629 = vadd.f32 %v539, %v628
        %v630 = vpop.f32.mrb[0].mxu0
        %v631 = vpop.f32.mrb[0].mxu0
        %v632 = vadd.f32 %v542, %v631
        %v633 = vpop.f32.mrb[0].mxu0
        %634 = vdwg.mxu0
        %v635 = vld [vmem:[#allocation2] sm:$0xe]
        %s636 = scalar_lea.vmem [#allocation6], 128
        %v637 = vld [vmem:[%s636] sm:$0xf]
        %v638 = vld [vmem:[%s636 + $0x4] sm:$0xf]
        %v639 = vld [vmem:[%s636 + $0x8] sm:$0xf]
        %v640 = vld [vmem:[%s636 + $0xc] sm:$0xf]
        %v641 = vld [vmem:[%s636 + $0x10] sm:$0xf]
        %v642 = vld [vmem:[%s636 + $0x14] sm:$0xf]
        %v643 = vld [vmem:[%s636 + $0x18] sm:$0xf]
        %v644 = vld [vmem:[%s636 + $0x1c] sm:$0xf]
        %v645 = vld [vmem:[%s636 + $0x20] sm:$0xf]
        %v646 = vld [vmem:[%s636 + $0x24] sm:$0xf]
        %v647 = vld [vmem:[%s636 + $0x28] sm:$0xf]
        %v648 = vld [vmem:[%s636 + $0x2c] sm:$0xf]
        %v649 = vld [vmem:[%s636 + $0x30] sm:$0xf]
        %v650 = vld [vmem:[%s636 + $0x34] sm:$0xf]
        %v651 = vld [vmem:[%s636 + $0x38] sm:$0xf]
        %v652 = vld [vmem:[%s636 + $0x3c] sm:$0xf]
        %v654 = vunpack.c.l.b16 %v635
        %v655 = vpack.c.b16 %v438, %v654
        %vm656 = vcmask 1046528
        %v657 = vrot.slane %v655, 1
        %v658 = vrot.slane %v441, 1
        %v659 = vsel %vm656, %v657, %v658
        %v677 = vunpack.c.l.b16 %v637
        %v678 = vunpack.c.l.b16 %v638
        %v679 = vunpack.c.l.b16 %v639
        %v680 = vunpack.c.l.b16 %v640
        %v681 = vunpack.c.l.b16 %v641
        %v682 = vunpack.c.l.b16 %v642
        %v683 = vunpack.c.l.b16 %v643
        %v684 = vunpack.c.l.b16 %v644
        %v685 = vunpack.c.l.b16 %v645
        %v686 = vunpack.c.l.b16 %v646
        %v687 = vunpack.c.l.b16 %v647
        %v688 = vunpack.c.l.b16 %v648
        %v689 = vunpack.c.l.b16 %v649
        %v690 = vunpack.c.l.b16 %v650
        %v691 = vunpack.c.l.b16 %v651
        %v692 = vunpack.c.l.b16 %v652
        %v693 = vpack.c.b16 %v678, %v677
        %v694 = vpack.c.b16 %v680, %v679
        %v695 = vpack.c.b16 %v682, %v681
        %v696 = vpack.c.b16 %v684, %v683
        %v697 = vpack.c.b16 %v686, %v685
        %v698 = vpack.c.b16 %v688, %v687
        %v699 = vpack.c.b16 %v690, %v689
        %v700 = vpack.c.b16 %v692, %v691
        %709 = vmatprep.subr.bf16.mxu0 0
        %710 = vmatpush1.bf16.msra.mxu0 %v693
        %711 = vmatprep.subr.bf16.mxu0 0
        %712 = vmatpush1.bf16.msra.mxu0 %v694
        %713 = vmatprep.subr.bf16.mxu0 0
        %714 = vmatpush1.bf16.msra.mxu0 %v695
        %715 = vmatprep.subr.bf16.mxu0 0
        %716 = vmatpush1.bf16.msra.mxu0 %v696
        %717 = vmatprep.subr.bf16.mxu0 0
        %718 = vmatpush1.bf16.msra.mxu0 %v697
        %719 = vmatprep.subr.bf16.mxu0 0
        %720 = vmatpush1.bf16.msra.mxu0 %v698
        %721 = vmatprep.subr.bf16.mxu0 0
        %722 = vmatpush1.bf16.msra.mxu0 %v699
        %723 = vmatprep.subr.bf16.mxu0 0
        %724 = vmatpush1.bf16.msra.mxu0 %v700
        %725 = vmatprep.subr.bf16.mxu0 0
        %726 = vmatpush1.bf16.msra.mxu0 0
        %727 = vmatprep.subr.bf16.mxu0 0
        %728 = vmatpush1.bf16.msra.mxu0 0
        %729 = vmatprep.subr.bf16.mxu0 0
        %730 = vmatpush1.bf16.msra.mxu0 0
        %731 = vmatprep.subr.bf16.mxu0 0
        %732 = vmatpush1.bf16.msra.mxu0 0
        %733 = vmatprep.subr.bf16.mxu0 0
        %734 = vmatpush1.bf16.msra.mxu0 0
        %735 = vmatprep.subr.bf16.mxu0 0
        %736 = vmatpush1.bf16.msra.mxu0 0
        %737 = vmatprep.subr.bf16.mxu0 0
        %738 = vmatpush1.bf16.msra.mxu0 0
        %739 = vmatprep.subr.bf16.mxu0 0
        %740 = vmatpush1.bf16.msra.mxu0 0
        %741 = vmatprep.mubr.bf16.mxu0 0
        %742 = vmatmul.mubr.bf16.gmra.mrb[0].mxu0 %v659
        %v743 = vpop.f32.mrb[0].mxu0
        %v744 = vadd.f32 0.0, %v743
        %v745 = vpop.f32.mrb[0].mxu0
        %v746 = vpop.f32.mrb[0].mxu0
        %v747 = vadd.f32 0.0, %v746
        %v748 = vpop.f32.mrb[0].mxu0
        %749 = vdwg.mxu0
        %v750 = vadd.f32 %v629, %v744
        %v751 = vadd.f32 %v632, %v747
        %v752 = vld [vmem:[%s2] sm:$0x1]
        %v754 = vlaneseq
        %v755 = vshrl.u32 %v754, 7
        %v756 = vsub.s32 0, %v755
        %v757 = vrot.slane %v752, %v756
        %v759 = vmul.f32 %v750, %v757
        %v760 = vmul.f32 %v751, %v757
        %v761 = vld [vmem:[%s3] sm:$0x1]
        %v763 = vlaneseq
        %v764 = vshrl.u32 %v763, 7
        %v765 = vsub.s32 0, %v764
        %v766 = vrot.slane %v761, %v765
        %v768 = vadd.f32 %v759, %v766
        %v769 = vadd.f32 %v760, %v766
        %vm770 = vcmp.gt.f32.partialorder %v768, 0.0
        %vm771 = vcmp.gt.f32.partialorder %v769, 0.0
        %v772 = vld [vmem:[%s4] sm:$0x1]
        %v774 = vlaneseq
        %v775 = vshrl.u32 %v774, 7
        %v776 = vsub.s32 0, %v775
        %v777 = vrot.slane %v772, %v776
        %v779 = vmul.f32 %v777, %v768
        %v780 = vmul.f32 %v777, %v769
        %v781 = vsel %vm770, %v768, %v779
        %v782 = vsel %vm771, %v769, %v780
        %v783 = vpack.c.bf16 %v782, %v781
        %v785 = vunpack.c.l.b16 %v783
        %v786 = vunpack.c.h.b16 %v783
        %v787 = vpack.c.b16 %v785, %v785
        %v788 = vpack.c.b16 %v786, %v786
        %v790 = vshrl.u32 %v787, 16
        %v792 = vrot.slane %v790, 7
        %v793 = vshll.u32 %v787, 16
        %v795 = vor.u32 %v792, %v793
        %v796 = vrot.slane %v792, 4
        %v798 = vshrl.u32 %v788, 16
        %v800 = vrot.slane %v798, 7
        %v801 = vshll.u32 %v788, 16
        %v803 = vor.u32 %v800, %v801
        %v804 = vsel %vm368, %v796, %v803
        %v805 = vrot.slane %v800, 4
        %v809 = vsel %vm390, %v795, %v398
        %810 = vst [vmem:[#allocation2] sm:$0xf] %v809
        %811 = vst [vmem:[#allocation2 + $0x4] sm:$0xf] %v804
        %v812 = vld [vmem:[#allocation2 + $0x8] sm:$0x1]
        %v813 = vsel %vm356, %v805, %v812
        %814 = vst [vmem:[#allocation2 + $0x8] sm:$0x1] %v813
        %v815 = vld [vmem:[#allocation2] sm:$0xf]
        %v816 = vld [vmem:[#allocation2 + $0x4] sm:$0xf]
        %v817 = vld [vmem:[#allocation8] sm:$0xf]
        %v818 = vld [vmem:[#allocation8 + $0x4] sm:$0xf]
        %v819 = vld [vmem:[#allocation8 + $0x8] sm:$0xf]
        %v820 = vld [vmem:[#allocation8 + $0xc] sm:$0xf]
        %v821 = vld [vmem:[#allocation8 + $0x10] sm:$0xf]
        %v822 = vld [vmem:[#allocation8 + $0x14] sm:$0xf]
        %v823 = vld [vmem:[#allocation8 + $0x18] sm:$0xf]
        %v824 = vld [vmem:[#allocation8 + $0x1c] sm:$0xf]
        %v825 = vld [vmem:[#allocation8 + $0x20] sm:$0xf]
        %v826 = vld [vmem:[#allocation8 + $0x24] sm:$0xf]
        %v827 = vld [vmem:[#allocation8 + $0x28] sm:$0xf]
        %v828 = vld [vmem:[#allocation8 + $0x2c] sm:$0xf]
        %v829 = vld [vmem:[#allocation8 + $0x30] sm:$0xf]
        %v830 = vld [vmem:[#allocation8 + $0x34] sm:$0xf]
        %v831 = vld [vmem:[#allocation8 + $0x38] sm:$0xf]
        %v832 = vld [vmem:[#allocation8 + $0x3c] sm:$0xf]
        %v833 = vld [vmem:[#allocation2 + $0x8] sm:$0x1]
        %s834 = scalar_lea.vmem [#allocation8], 64
        %v835 = vld [vmem:[%s834] sm:$0xf]
        %v836 = vld [vmem:[%s834 + $0x4] sm:$0xf]
        %v837 = vld [vmem:[%s834 + $0x8] sm:$0xf]
        %v838 = vld [vmem:[%s834 + $0xc] sm:$0xf]
        %v839 = vld [vmem:[%s834 + $0x10] sm:$0xf]
        %v840 = vld [vmem:[%s834 + $0x14] sm:$0xf]
        %v841 = vld [vmem:[%s834 + $0x18] sm:$0xf]
        %v842 = vld [vmem:[%s834 + $0x1c] sm:$0xf]
        %v843 = vld [vmem:[%s834 + $0x20] sm:$0xf]
        %v844 = vld [vmem:[%s834 + $0x24] sm:$0xf]
        %v845 = vld [vmem:[%s834 + $0x28] sm:$0xf]
        %v846 = vld [vmem:[%s834 + $0x2c] sm:$0xf]
        %v847 = vld [vmem:[%s834 + $0x30] sm:$0xf]
        %v848 = vld [vmem:[%s834 + $0x34] sm:$0xf]
        %v849 = vld [vmem:[%s834 + $0x38] sm:$0xf]
        %v850 = vld [vmem:[%s834 + $0x3c] sm:$0xf]
        %v854 = vunpack.c.l.b16 %v815
        %v855 = vunpack.c.l.b16 %v816
        %v856 = vunpack.c.l.b16 %v833
        %v857 = vpack.c.b16 %v855, %v854
        %v858 = vpack.c.b16 %v856, %v856
        %v860 = vshrl.u32 %v857, 16
        %v862 = vshll.u32 %v857, 16
        %v864 = vrot.slane %v862, 1
        %v865 = vor.u32 %v860, %v864
        %v867 = vshll.u32 %v858, 16
        %v869 = vrot.slane %v867, 1
        %v870 = vsel %vm442, %v865, %v869
        %v888 = vunpack.c.l.b16 %v835
        %v889 = vunpack.c.l.b16 %v836
        %v890 = vunpack.c.l.b16 %v837
        %v891 = vunpack.c.l.b16 %v838
        %v892 = vunpack.c.l.b16 %v839
        %v893 = vunpack.c.l.b16 %v840
        %v894 = vunpack.c.l.b16 %v841
        %v895 = vunpack.c.l.b16 %v842
        %v896 = vunpack.c.l.b16 %v843
        %v897 = vunpack.c.l.b16 %v844
        %v898 = vunpack.c.l.b16 %v845
        %v899 = vunpack.c.l.b16 %v846
        %v900 = vunpack.c.l.b16 %v847
        %v901 = vunpack.c.l.b16 %v848
        %v902 = vunpack.c.l.b16 %v849
        %v903 = vunpack.c.l.b16 %v850
        %v904 = vpack.c.b16 %v889, %v888
        %v905 = vpack.c.b16 %v891, %v890
        %v906 = vpack.c.b16 %v893, %v892
        %v907 = vpack.c.b16 %v895, %v894
        %v908 = vpack.c.b16 %v897, %v896
        %v909 = vpack.c.b16 %v899, %v898
        %v910 = vpack.c.b16 %v901, %v900
        %v911 = vpack.c.b16 %v903, %v902
        %920 = vmatprep.subr.bf16.mxu0 0
        %921 = vmatpush1.bf16.msra.mxu0 %v904
        %922 = vmatprep.subr.bf16.mxu0 0
        %923 = vmatpush1.bf16.msra.mxu0 %v905
        %924 = vmatprep.subr.bf16.mxu0 0
        %925 = vmatpush1.bf16.msra.mxu0 %v906
        %926 = vmatprep.subr.bf16.mxu0 0
        %927 = vmatpush1.bf16.msra.mxu0 %v907
        %928 = vmatprep.subr.bf16.mxu0 0
        %929 = vmatpush1.bf16.msra.mxu0 %v908
        %930 = vmatprep.subr.bf16.mxu0 0
        %931 = vmatpush1.bf16.msra.mxu0 %v909
        %932 = vmatprep.subr.bf16.mxu0 0
        %933 = vmatpush1.bf16.msra.mxu0 %v910
        %934 = vmatprep.subr.bf16.mxu0 0
        %935 = vmatpush1.bf16.msra.mxu0 %v911
        %936 = vmatprep.subr.bf16.mxu0 0
        %937 = vmatpush1.bf16.msra.mxu0 0
        %938 = vmatprep.subr.bf16.mxu0 0
        %939 = vmatpush1.bf16.msra.mxu0 0
        %940 = vmatprep.subr.bf16.mxu0 0
        %941 = vmatpush1.bf16.msra.mxu0 0
        %942 = vmatprep.subr.bf16.mxu0 0
        %943 = vmatpush1.bf16.msra.mxu0 0
        %944 = vmatprep.subr.bf16.mxu0 0
        %945 = vmatpush1.bf16.msra.mxu0 0
        %946 = vmatprep.subr.bf16.mxu0 0
        %947 = vmatpush1.bf16.msra.mxu0 0
        %948 = vmatprep.subr.bf16.mxu0 0
        %949 = vmatpush1.bf16.msra.mxu0 0
        %950 = vmatprep.subr.bf16.mxu0 0
        %951 = vmatpush1.bf16.msra.mxu0 0
        %952 = vmatprep.mubr.bf16.mxu0 0
        %953 = vmatmul.mubr.bf16.gmra.mrb[0].mxu0 %v870
        %v954 = vpop.f32.mrb[0].mxu0
        %v955 = vadd.f32 0.0, %v954
        %v956 = vpop.f32.mrb[0].mxu0
        %v957 = vpop.f32.mrb[0].mxu0
        %v958 = vadd.f32 0.0, %v957
        %v959 = vpop.f32.mrb[0].mxu0
        %960 = vdwg.mxu0
        %v978 = vunpack.c.l.b16 %v817
        %v979 = vunpack.c.l.b16 %v818
        %v980 = vunpack.c.l.b16 %v819
        %v981 = vunpack.c.l.b16 %v820
        %v982 = vunpack.c.l.b16 %v821
        %v983 = vunpack.c.l.b16 %v822
        %v984 = vunpack.c.l.b16 %v823
        %v985 = vunpack.c.l.b16 %v824
        %v986 = vunpack.c.l.b16 %v825
        %v987 = vunpack.c.l.b16 %v826
        %v988 = vunpack.c.l.b16 %v827
        %v989 = vunpack.c.l.b16 %v828
        %v990 = vunpack.c.l.b16 %v829
        %v991 = vunpack.c.l.b16 %v830
        %v992 = vunpack.c.l.b16 %v831
        %v993 = vunpack.c.l.b16 %v832
        %v994 = vpack.c.b16 %v979, %v978
        %v995 = vpack.c.b16 %v981, %v980
        %v996 = vpack.c.b16 %v983, %v982
        %v997 = vpack.c.b16 %v985, %v984
        %v998 = vpack.c.b16 %v987, %v986
        %v999 = vpack.c.b16 %v989, %v988
        %v1000 = vpack.c.b16 %v991, %v990
        %v1001 = vpack.c.b16 %v993, %v992
        %1010 = vmatprep.subr.bf16.mxu0 0
        %1011 = vmatpush1.bf16.msra.mxu0 %v994
        %1012 = vmatprep.subr.bf16.mxu0 0
        %1013 = vmatpush1.bf16.msra.mxu0 %v995
        %1014 = vmatprep.subr.bf16.mxu0 0
        %1015 = vmatpush1.bf16.msra.mxu0 %v996
        %1016 = vmatprep.subr.bf16.mxu0 0
        %1017 = vmatpush1.bf16.msra.mxu0 %v997
        %1018 = vmatprep.subr.bf16.mxu0 0
        %1019 = vmatpush1.bf16.msra.mxu0 %v998
        %1020 = vmatprep.subr.bf16.mxu0 0
        %1021 = vmatpush1.bf16.msra.mxu0 %v999
        %1022 = vmatprep.subr.bf16.mxu0 0
        %1023 = vmatpush1.bf16.msra.mxu0 %v1000
        %1024 = vmatprep.subr.bf16.mxu0 0
        %1025 = vmatpush1.bf16.msra.mxu0 %v1001
        %1026 = vmatprep.subr.bf16.mxu0 0
        %1027 = vmatpush1.bf16.msra.mxu0 0
        %1028 = vmatprep.subr.bf16.mxu0 0
        %1029 = vmatpush1.bf16.msra.mxu0 0
        %1030 = vmatprep.subr.bf16.mxu0 0
        %1031 = vmatpush1.bf16.msra.mxu0 0
        %1032 = vmatprep.subr.bf16.mxu0 0
        %1033 = vmatpush1.bf16.msra.mxu0 0
        %1034 = vmatprep.subr.bf16.mxu0 0
        %1035 = vmatpush1.bf16.msra.mxu0 0
        %1036 = vmatprep.subr.bf16.mxu0 0
        %1037 = vmatpush1.bf16.msra.mxu0 0
        %1038 = vmatprep.subr.bf16.mxu0 0
        %1039 = vmatpush1.bf16.msra.mxu0 0
        %1040 = vmatprep.subr.bf16.mxu0 0
        %1041 = vmatpush1.bf16.msra.mxu0 0
        %1042 = vmatprep.mubr.bf16.mxu0 0
        %1043 = vmatmul.mubr.bf16.gmra.mrb[0].mxu0 %v857
        %v1044 = vpop.f32.mrb[0].mxu0
        %v1045 = vadd.f32 %v955, %v1044
        %v1046 = vpop.f32.mrb[0].mxu0
        %v1047 = vpop.f32.mrb[0].mxu0
        %v1048 = vadd.f32 %v958, %v1047
        %v1049 = vpop.f32.mrb[0].mxu0
        %1050 = vdwg.mxu0
        %v1051 = vld [vmem:[#allocation2] sm:$0xe]
        %s1052 = scalar_lea.vmem [#allocation8], 128
        %v1053 = vld [vmem:[%s1052] sm:$0xf]
        %v1054 = vld [vmem:[%s1052 + $0x4] sm:$0xf]
        %v1055 = vld [vmem:[%s1052 + $0x8] sm:$0xf]
        %v1056 = vld [vmem:[%s1052 + $0xc] sm:$0xf]
        %v1057 = vld [vmem:[%s1052 + $0x10] sm:$0xf]
        %v1058 = vld [vmem:[%s1052 + $0x14] sm:$0xf]
        %v1059 = vld [vmem:[%s1052 + $0x18] sm:$0xf]
        %v1060 = vld [vmem:[%s1052 + $0x1c] sm:$0xf]
        %v1061 = vld [vmem:[%s1052 + $0x20] sm:$0xf]
        %v1062 = vld [vmem:[%s1052 + $0x24] sm:$0xf]
        %v1063 = vld [vmem:[%s1052 + $0x28] sm:$0xf]
        %v1064 = vld [vmem:[%s1052 + $0x2c] sm:$0xf]
        %v1065 = vld [vmem:[%s1052 + $0x30] sm:$0xf]
        %v1066 = vld [vmem:[%s1052 + $0x34] sm:$0xf]
        %v1067 = vld [vmem:[%s1052 + $0x38] sm:$0xf]
        %v1068 = vld [vmem:[%s1052 + $0x3c] sm:$0xf]
        %v1070 = vunpack.c.l.b16 %v1051
        %v1071 = vpack.c.b16 %v855, %v1070
        %v1072 = vrot.slane %v1071, 1
        %v1073 = vrot.slane %v858, 1
        %v1074 = vsel %vm656, %v1072, %v1073
        %v1092 = vunpack.c.l.b16 %v1053
        %v1093 = vunpack.c.l.b16 %v1054
        %v1094 = vunpack.c.l.b16 %v1055
        %v1095 = vunpack.c.l.b16 %v1056
        %v1096 = vunpack.c.l.b16 %v1057
        %v1097 = vunpack.c.l.b16 %v1058
        %v1098 = vunpack.c.l.b16 %v1059
        %v1099 = vunpack.c.l.b16 %v1060
        %v1100 = vunpack.c.l.b16 %v1061
        %v1101 = vunpack.c.l.b16 %v1062
        %v1102 = vunpack.c.l.b16 %v1063
        %v1103 = vunpack.c.l.b16 %v1064
        %v1104 = vunpack.c.l.b16 %v1065
        %v1105 = vunpack.c.l.b16 %v1066
        %v1106 = vunpack.c.l.b16 %v1067
        %v1107 = vunpack.c.l.b16 %v1068
        %v1108 = vpack.c.b16 %v1093, %v1092
        %v1109 = vpack.c.b16 %v1095, %v1094
        %v1110 = vpack.c.b16 %v1097, %v1096
        %v1111 = vpack.c.b16 %v1099, %v1098
        %v1112 = vpack.c.b16 %v1101, %v1100
        %v1113 = vpack.c.b16 %v1103, %v1102
        %v1114 = vpack.c.b16 %v1105, %v1104
        %v1115 = vpack.c.b16 %v1107, %v1106
        %1124 = vmatprep.subr.bf16.mxu0 0
        %1125 = vmatpush1.bf16.msra.mxu0 %v1108
        %1126 = vmatprep.subr.bf16.mxu0 0
        %1127 = vmatpush1.bf16.msra.mxu0 %v1109
        %1128 = vmatprep.subr.bf16.mxu0 0
        %1129 = vmatpush1.bf16.msra.mxu0 %v1110
        %1130 = vmatprep.subr.bf16.mxu0 0
        %1131 = vmatpush1.bf16.msra.mxu0 %v1111
        %1132 = vmatprep.subr.bf16.mxu0 0
        %1133 = vmatpush1.bf16.msra.mxu0 %v1112
        %1134 = vmatprep.subr.bf16.mxu0 0
        %1135 = vmatpush1.bf16.msra.mxu0 %v1113
        %1136 = vmatprep.subr.bf16.mxu0 0
        %1137 = vmatpush1.bf16.msra.mxu0 %v1114
        %1138 = vmatprep.subr.bf16.mxu0 0
        %1139 = vmatpush1.bf16.msra.mxu0 %v1115
        %1140 = vmatprep.subr.bf16.mxu0 0
        %1141 = vmatpush1.bf16.msra.mxu0 0
        %1142 = vmatprep.subr.bf16.mxu0 0
        %1143 = vmatpush1.bf16.msra.mxu0 0
        %1144 = vmatprep.subr.bf16.mxu0 0
        %1145 = vmatpush1.bf16.msra.mxu0 0
        %1146 = vmatprep.subr.bf16.mxu0 0
        %1147 = vmatpush1.bf16.msra.mxu0 0
        %1148 = vmatprep.subr.bf16.mxu0 0
        %1149 = vmatpush1.bf16.msra.mxu0 0
        %1150 = vmatprep.subr.bf16.mxu0 0
        %1151 = vmatpush1.bf16.msra.mxu0 0
        %1152 = vmatprep.subr.bf16.mxu0 0
        %1153 = vmatpush1.bf16.msra.mxu0 0
        %1154 = vmatprep.subr.bf16.mxu0 0
        %1155 = vmatpush1.bf16.msra.mxu0 0
        %1156 = vmatprep.mubr.bf16.mxu0 0
        %1157 = vmatmul.mubr.bf16.gmra.mrb[0].mxu0 %v1074
        %v1158 = vpop.f32.mrb[0].mxu0
        %v1159 = vadd.f32 0.0, %v1158
        %v1160 = vpop.f32.mrb[0].mxu0
        %v1161 = vpop.f32.mrb[0].mxu0
        %v1162 = vadd.f32 0.0, %v1161
        %v1163 = vpop.f32.mrb[0].mxu0
        %1164 = vdwg.mxu0
        %v1165 = vadd.f32 %v1045, %v1159
        %v1166 = vadd.f32 %v1048, %v1162
        %v1167 = vld [vmem:[%s6] sm:$0x1]
        %v1169 = vlaneseq
        %v1170 = vshrl.u32 %v1169, 7
        %v1171 = vsub.s32 0, %v1170
        %v1172 = vrot.slane %v1167, %v1171
        %v1174 = vmul.f32 %v1165, %v1172
        %v1175 = vmul.f32 %v1166, %v1172
        %v1176 = vld [vmem:[%s7] sm:$0x1]
        %v1178 = vlaneseq
        %v1179 = vshrl.u32 %v1178, 7
        %v1180 = vsub.s32 0, %v1179
        %v1181 = vrot.slane %v1176, %v1180
        %v1183 = vadd.f32 %v1174, %v1181
        %v1184 = vadd.f32 %v1175, %v1181
        %v1185 = vunpack.c.l.bf16 %v365
        %v1186 = vunpack.c.l.bf16 %v366
        %v1187 = vadd.f32 %v1183, %v1185
        %v1188 = vadd.f32 %v1184, %v1186
        %vm1189 = vcmp.gt.f32.partialorder %v1187, 0.0
        %vm1190 = vcmp.gt.f32.partialorder %v1188, 0.0
        %v1191 = vld [vmem:[%s4] sm:$0x1]
        %v1193 = vlaneseq
        %v1194 = vshrl.u32 %v1193, 7
        %v1195 = vsub.s32 0, %v1194
        %v1196 = vrot.slane %v1191, %v1195
        %v1198 = vmul.f32 %v1196, %v1187
        %v1199 = vmul.f32 %v1196, %v1188
        %v1200 = vsel %vm1189, %v1187, %v1198
        %v1201 = vsel %vm1190, %v1188, %v1199
        %v1202 = vpack.c.bf16 %v1201, %v1200
        %v1204 = vunpack.c.l.b16 %v1202
        %v1205 = vunpack.c.h.b16 %v1202
        %v1206 = vpack.c.b16 %v1204, %v1204
        %v1207 = vpack.c.b16 %v1205, %v1205
        %1210 = vst [vmem:[%s352] sm:$0xf] %v1206
        %1211 = vst [vmem:[%s352 + $0x4] sm:$0xf] %v1207
        %s1212 = sand.u32 %s207, 1
        %s1213 = scalar_lea.sflag [#allocation5], %s1212
        %s1214 = sand.u32 %s207, 1
        %s1215 = smul.addr %s1214, 8
        %s1216 = scalar_lea.vmem [#allocation9], %s1215
        // Predicated region
        $region65: #{tpu_custom_call.1} parent=51 // pred_check
          %p1217 = pneg %p217
        $region66: #{tpu_custom_call.1} parent=51 // pred_check_branch
          %1219 = sbr.rel (%p1217) target = $region68
        $region67: #{tpu_custom_call.1} parent=51 // pred_region
          %s1221 = ssub.s32 128, 128
          %1222 = vsyncadd %s1213, %s1221
          %s1223 = smul.addr %s26, 2
          %s1224 = smul.addr %s1223, 64
          %s1225 = scalar_lea.hbm %s8, %s1224
          %s1226 = sshll.u32 %s1216, 4
          %s1227 = int_to_ptr.vmem [resolvable:$true] %s1226
          %1232 = dma.vmem_to_hbm [thread:$0]  %s1227, 128, %s1225, %s1213, 64, 64, 4
        $region68: #{tpu_custom_call.1} parent=51 // pred_fallthru
          _
      $region52: #{tpu_custom_call.1} parent=5 // pred_fallthru
        _
      %p1233 = scmp.le.s32.totalorder 2, %s21
      // Predicated region
      $region69: #{tpu_custom_call.1} parent=5 // pred_check
        %p1234 = pneg %p1233
      $region70: #{tpu_custom_call.1} parent=5 // pred_check_branch
        %1236 = sbr.rel (%p1234) target = $region72
      $region71: #{tpu_custom_call.1} parent=5 // pred_region
        %s1237 = ssub.s32 %s21, 2
        // Predicated region
        $region73: #{tpu_custom_call.1} parent=71 // pred_check
          %p1238 = pneg %p223
        $region74: #{tpu_custom_call.1} parent=71 // pred_check_branch
          %1240 = sbr.rel (%p1238) target = $region76
        $region75: #{tpu_custom_call.1} parent=71 // pred_region
          %s1241 = sand.u32 %s208, 1
          %s1242 = scalar_lea.sflag [#allocation5], %s1241
          %s1243 = sand.u32 %s208, 1
          %s1244 = smul.addr %s1243, 8
          %s1245 = scalar_lea.vmem [#allocation9], %s1244
          %1246 = dma.done %s1242, 128
        $region76: #{tpu_custom_call.1} parent=71 // pred_fallthru
          _
      $region72: #{tpu_custom_call.1} parent=5 // pred_fallthru
        _
    $region6: #{tpu_custom_call.1} parent=1 // loop_footer
      %s25 = sadd.s32 1, %s21
    $region7: #{tpu_custom_call.1} parent=1 // loop_footer_branch
      %20 = sbr.rel target = $region3
    $region8: #{tpu_custom_call.1} parent=1 // loop_exit
      _
    %1247 = vsyncpa [#allocation4], 1
    %s1248 = scalar_lea.sflag [#allocation4], 1
    %1249 = vsyncpa %s1248, 1
    %1250 = vsyncpa [#allocation7], 1
    %1251 = vsyncpa [#allocation5], 1
    %s1252 = scalar_lea.sflag [#allocation5], 1
    %1253 = vsyncpa %s1252, 1

</llo_original>
